<compile_context>
chip_gen: v5e
topology: v5e:2x2
jax: 0.10.0
libtpu: 0.0.40
codegen_flags: <defaults>
</compile_context>

<pallas_src>
import functools

import jax
import jax.numpy as jnp
from jax import lax
from jax.experimental import pallas as pl
from jax.experimental.pallas import tpu as pltpu

BN_EPS = 1e-5


def _round_up(x, m):
    return ((x + m - 1) // m) * m


def _vmem_capacity_bytes():
    try:
        return int(pltpu.get_tpu_info().vmem_capacity_bytes)
    except Exception:
        return 64 << 20  # conservative (v7x physical VMEM)


# -----------------------------------------------------------------------------
# Fused single-pass kernel: gated activation + batch stats + in-place BN affine.
# Output block index is constant -> the full output stays VMEM-resident and is
# written to HBM exactly once, after the last grid step.
# -----------------------------------------------------------------------------
def _fused_kernel(x_ref, w_ref, b_ref, gamma_ref, beta_ref, out_ref,
                  sum_ref, sumsq_ref, *, inv_batch, tb):
    i = pl.program_id(0)
    n = pl.num_programs(0)

    @pl.when(i == 0)
    def _init():
        sum_ref[...] = jnp.zeros_like(sum_ref)
        sumsq_ref[...] = jnp.zeros_like(sumsq_ref)

    x = x_ref[...]                                            # native dtype -> MXU
    # w_ref is W^T ([in, out]) so this is a plain matmul (no in-kernel transpose).
    logits = lax.dot_general(
        x, w_ref[...],
        dimension_numbers=(((1,), (0,)), ((), ())),
        preferred_element_type=jnp.float32,
    ) + b_ref[...].astype(jnp.float32)
    gates = jax.nn.sigmoid(logits)                            # EUP
    out = x.astype(jnp.float32) * gates                       # [tb, D] f32

    sum_ref[...] += jnp.sum(out, axis=0, keepdims=True)           # [1, D]
    sumsq_ref[...] += jnp.sum(out * out, axis=0, keepdims=True)   # [1, D]

    # Stash this tile's rows into the VMEM-resident output.
    row = pl.multiple_of(i * tb, 8)
    out_ref[pl.ds(row, tb), :] = out.astype(out_ref.dtype)

    @pl.when(i == n - 1)
    def _finalize():
        mean = sum_ref[...] * inv_batch                           # [1, D]
        var = jnp.maximum(sumsq_ref[...] * inv_batch - mean * mean, 0.0)
        inv_std = lax.rsqrt(var + BN_EPS)                         # EUP
        scale = inv_std * gamma_ref[...].astype(jnp.float32)
        shift = beta_ref[...].astype(jnp.float32) - mean * scale
        y = out_ref[...].astype(jnp.float32)                      # full resident slab
        out_ref[...] = (y * scale + shift).astype(out_ref.dtype)
        # TODO(synk): dropout with rate>0 would use pltpu.prng_seed /
        # prng_random_bits here; the module's default rate is 0 (identity).


# -----------------------------------------------------------------------------
# Two-pass fallback (batch too large to keep resident in VMEM).
# -----------------------------------------------------------------------------
def _phase1_kernel(x_ref, w_ref, b_ref, gamma_ref, beta_ref,
                   out_ref, scale_ref, shift_ref,
                   sum_ref, sumsq_ref, *, inv_batch):
    i = pl.program_id(0)

    @pl.when(i == 0)
    def _init():
        sum_ref[...] = jnp.zeros_like(sum_ref)
        sumsq_ref[...] = jnp.zeros_like(sumsq_ref)

    x = x_ref[...]
    logits = lax.dot_general(
        x, w_ref[...],
        dimension_numbers=(((1,), (0,)), ((), ())),
        preferred_element_type=jnp.float32,
    ) + b_ref[...].astype(jnp.float32)
    gates = jax.nn.sigmoid(logits)
    out = x.astype(jnp.float32) * gates

    out_ref[...] = out.astype(out_ref.dtype)                      # x.dtype to HBM
    sum_ref[...] += jnp.sum(out, axis=0, keepdims=True)
    sumsq_ref[...] += jnp.sum(out * out, axis=0, keepdims=True)

    @pl.when(i == pl.num_programs(0) - 1)
    def _finalize():
        # Hoist the BN scale/shift computation out of phase 2 (done once here).
        mean = sum_ref[...] * inv_batch
        var = jnp.maximum(sumsq_ref[...] * inv_batch - mean * mean, 0.0)
        inv_std = lax.rsqrt(var + BN_EPS)
        scale = inv_std * gamma_ref[...].astype(jnp.float32)
        scale_ref[...] = scale
        shift_ref[...] = beta_ref[...].astype(jnp.float32) - mean * scale


def _phase2_kernel(y_ref, scale_ref, shift_ref, o_ref):
    # Pure streaming fused BN affine: one mul + one add per element.
    o_ref[...] = (y_ref[...].astype(jnp.float32) * scale_ref[...]
                  + shift_ref[...]).astype(o_ref.dtype)


# -----------------------------------------------------------------------------
# Wrapper.
# -----------------------------------------------------------------------------
def gating_layer(x, w, b, gamma, beta, *, block_b=512):
    """x: [B, D]; w: [D, D] in PyTorch [out, in] layout; b, gamma, beta: [D]."""
    B, D = x.shape
    assert w.shape == (D, D)

    # Lane-dense feature dim and 8-aligned batch tiles.
    D_pad = _round_up(D, 128)
    tb = min(_round_up(block_b, 8), _round_up(B, 8))
    B_pad = _round_up(B, tb)
    n_tiles = B_pad // tb

    # Pre-transpose the weight once (O(D^2)) to [in, out] layout.
    w_t = w.T
    x_p = (jnp.pad(x, ((0, B_pad - B), (0, D_pad - D)))
           if (B_pad, D_pad) != (B, D) else x)
    if D_pad != D:
        w_t = jnp.pad(w_t, ((0, D_pad - D), (0, D_pad - D)))
        b_p = jnp.pad(b, (0, D_pad - D))
        gamma_p = jnp.pad(gamma, (0, D_pad - D))
        beta_p = jnp.pad(beta, (0, D_pad - D))
    else:
        b_p, gamma_p, beta_p = b, gamma, beta

    b2 = b_p.reshape(1, D_pad)
    gamma2 = gamma_p.reshape(1, D_pad)
    beta2 = beta_p.reshape(1, D_pad)

    xbytes = jnp.dtype(x.dtype).itemsize
    wbytes = jnp.dtype(w_t.dtype).itemsize

    # Generation-aware VMEM budget (128 MiB v5e/v6e, 64 MiB v7x), 15% headroom.
    vmem_budget = int(_vmem_capacity_bytes() * 0.85)

    # Conservative estimates: inputs (and possibly the resident output) may be
    # multi-buffered by Pallas, so count the invariant weight / output twice.
    vec_bytes = 8 * D_pad * 4
    fused_vmem = (2 * tb * D_pad * xbytes          # x tiles (double-buffered)
                  + 2 * D_pad * D_pad * wbytes     # weight (counted twice)
                  + 2 * B_pad * D_pad * xbytes     # resident output (counted twice)
                  + 2 * D_pad * 4                  # sum/sumsq scratch
                  + vec_bytes)
    use_fused = fused_vmem <= vmem_budget

    if use_fused:
        # ---- single pass: gated activation + stats + in-place BN ----
        out_p = pl.pallas_call(
            functools.partial(_fused_kernel, inv_batch=1.0 / B, tb=tb),
            out_shape=jax.ShapeDtypeStruct((B_pad, D_pad), x.dtype),
            grid=(n_tiles,),
            in_specs=[
                pl.BlockSpec((tb, D_pad), lambda i: (i, 0)),      # x tile
                pl.BlockSpec((D_pad, D_pad), lambda i: (0, 0)),   # W^T (resident)
                pl.BlockSpec((1, D_pad), lambda i: (0, 0)),       # bias
                pl.BlockSpec((1, D_pad), lambda i: (0, 0)),       # gamma
                pl.BlockSpec((1, D_pad), lambda i: (0, 0)),       # beta
            ],
            out_specs=pl.BlockSpec((B_pad, D_pad), lambda i: (0, 0)),  # resident
            scratch_shapes=[pltpu.VMEM((1, D_pad), jnp.float32),
                            pltpu.VMEM((1, D_pad), jnp.float32)],
            compiler_params=pltpu.CompilerParams(
                dimension_semantics=("arbitrary",),   # stats accumulate over tiles
                vmem_limit_bytes=int(min(max(fused_vmem, 4 << 20), vmem_budget)),
            ),
        )(x_p, w_t, b2, gamma2, beta2)
        return out_p[:B, :D]

    # ---- two-pass fallback: out_pre streamed in x.dtype, then BN affine ----
    twopass_vmem = (4 * tb * D_pad * xbytes        # x + out_pre tiles, 2-buffered
                    + 2 * D_pad * D_pad * wbytes   # weight (counted twice)
                    + 2 * D_pad * 4                # sum/sumsq scratch
                    + 2 * vec_bytes)
    vmem_limit = int(min(max(twopass_vmem, 4 << 20), vmem_budget))

    out_pre, scale, shift = pl.pallas_call(
        functools.partial(_phase1_kernel, inv_batch=1.0 / B),
        out_shape=(
            jax.ShapeDtypeStruct((B_pad, D_pad), x.dtype),   # out_pre in x.dtype
            jax.ShapeDtypeStruct((1, D_pad), jnp.float32),   # scale
            jax.ShapeDtypeStruct((1, D_pad), jnp.float32),   # shift
        ),
        grid=(n_tiles,),
        in_specs=[
            pl.BlockSpec((tb, D_pad), lambda i: (i, 0)),
            pl.BlockSpec((D_pad, D_pad), lambda i: (0, 0)),
            pl.BlockSpec((1, D_pad), lambda i: (0, 0)),
            pl.BlockSpec((1, D_pad), lambda i: (0, 0)),
            pl.BlockSpec((1, D_pad), lambda i: (0, 0)),
        ],
        out_specs=(
            pl.BlockSpec((tb, D_pad), lambda i: (i, 0)),
            pl.BlockSpec((1, D_pad), lambda i: (0, 0)),
            pl.BlockSpec((1, D_pad), lambda i: (0, 0)),
        ),
        scratch_shapes=[pltpu.VMEM((1, D_pad), jnp.float32),
                        pltpu.VMEM((1, D_pad), jnp.float32)],
        compiler_params=pltpu.CompilerParams(
            dimension_semantics=("arbitrary",),
            vmem_limit_bytes=vmem_limit,
        ),
    )(x_p, w_t, b2, gamma2, beta2)

    out_p = pl.pallas_call(
        _phase2_kernel,
        out_shape=jax.ShapeDtypeStruct((B_pad, D_pad), x.dtype),
        grid=(n_tiles,),
        in_specs=[
            pl.BlockSpec((tb, D_pad), lambda i: (i, 0)),
            pl.BlockSpec((1, D_pad), lambda i: (0, 0)),
            pl.BlockSpec((1, D_pad), lambda i: (0, 0)),
        ],
        out_specs=pl.BlockSpec((tb, D_pad), lambda i: (i, 0)),
        compiler_params=pltpu.CompilerParams(
            dimension_semantics=("parallel",),    # independent tiles -> megacore
            vmem_limit_bytes=vmem_limit,
        ),
    )(out_pre, scale, shift)
    return out_p[:B, :D]


def reference(x, w, b, gamma, beta):
    """Plain-JAX reference mirroring the PyTorch forward (train-mode BN)."""
    gates = jax.nn.sigmoid(x @ w.T + b)
    out = x * gates
    mean = out.mean(axis=0, keepdims=True)
    var = ((out - mean) ** 2).mean(axis=0, keepdims=True)
    return (out - mean) / jnp.sqrt(var + BN_EPS) * gamma + beta


if __name__ == "__main__":
    key = jax.random.PRNGKey(0)
    B, D = 8, 32  # block_in_dim == block_out_dim == 32

    kx, kw, kb = jax.random.split(key, 3)
    x = jax.random.normal(kx, (B, D), dtype=jnp.float32)

    # PyTorch nn.Linear init: U(-1/sqrt(in_dim), 1/sqrt(in_dim))
    bound = 1.0 / (D ** 0.5)
    w = jax.random.uniform(kw, (D, D), minval=-bound, maxval=bound, dtype=jnp.float32)
    b = jax.random.uniform(kb, (D,), minval=-bound, maxval=bound, dtype=jnp.float32)

    # BatchNorm1d init: weight=1, bias=0
    gamma = jnp.ones((D,), dtype=jnp.float32)
    beta = jnp.zeros((D,), dtype=jnp.float32)

    out = gating_layer(x, w, b, gamma, beta)
    jax.block_until_ready(out)

    ref = reference(x, w, b, gamma, beta)
    assert out.shape == (B, D)
    assert jnp.allclose(out, ref, atol=1e-4, rtol=1e-4), "mismatch vs reference"

    print("KERNEL_OK")
</pallas_src>

<mosaic_0001>
module attributes {stable_mosaic.version = 11 : i64} {
  func.func @_fused_kernel(%arg0: i32, %arg1: memref<8x128xf32, #tpu.memory_space<vmem>>, %arg2: memref<128x128xf32, #tpu.memory_space<vmem>>, %arg3: memref<1x128xf32, #tpu.memory_space<vmem>>, %arg4: memref<1x128xf32, #tpu.memory_space<vmem>>, %arg5: memref<1x128xf32, #tpu.memory_space<vmem>>, %arg6: memref<8x128xf32, #tpu.memory_space<vmem>>, %arg7: memref<1x128xf32, #tpu.memory_space<vmem>>, %arg8: memref<1x128xf32, #tpu.memory_space<vmem>>) attributes {dimension_semantics = [#tpu.dimension_semantics<arbitrary>], iteration_bounds = array<i64: 1>, scalar_prefetch = 0 : i64, scratch_operands = 2 : i64, tpu.core_type = #tpu.core_type<tc>, window_params = [{transform_indices = @transform_0, window_bounds = array<i64: 8, 128>}, {pipeline_mode = #tpu.pipeline_mode<synchronous>, transform_indices = @transform_1, window_bounds = array<i64: 128, 128>}, {pipeline_mode = #tpu.pipeline_mode<synchronous>, transform_indices = @transform_2, window_bounds = array<i64: 1, 128>}, {pipeline_mode = #tpu.pipeline_mode<synchronous>, transform_indices = @transform_3, window_bounds = array<i64: 1, 128>}, {pipeline_mode = #tpu.pipeline_mode<synchronous>, transform_indices = @transform_4, window_bounds = array<i64: 1, 128>}, {pipeline_mode = #tpu.pipeline_mode<synchronous>, transform_indices = @transform_5, window_bounds = array<i64: 8, 128>}]} {
    %c0_i32 = arith.constant 0 : i32
    %0 = arith.cmpi eq, %arg0, %c0_i32 : i32
    %1 = arith.extui %0 : i1 to i32
    %c0_i32_0 = arith.constant 0 : i32
    %2 = arith.cmpi ne, %1, %c0_i32_0 : i32
    scf.if %2 {
      %cst_20 = arith.constant 0.000000e+00 : f32
      %33 = vector.broadcast %cst_20 : f32 to vector<1x128xf32>
      %c0_21 = arith.constant 0 : index
      %c0_22 = arith.constant 0 : index
      %34 = vector.load %arg7[%c0_21, %c0_22] : memref<1x128xf32, #tpu.memory_space<vmem>>, vector<1x128xf32>
      tpu.vector_store %arg7[%c0_21, %c0_22], %33 {strides = array<i32>} : memref<1x128xf32, #tpu.memory_space<vmem>>, vector<1x128xf32>,
      %cst_23 = arith.constant 0.000000e+00 : f32
      %35 = vector.broadcast %cst_23 : f32 to vector<1x128xf32>
      %c0_24 = arith.constant 0 : index
      %c0_25 = arith.constant 0 : index
      %36 = vector.load %arg8[%c0_24, %c0_25] : memref<1x128xf32, #tpu.memory_space<vmem>>, vector<1x128xf32>
      tpu.vector_store %arg8[%c0_24, %c0_25], %35 {strides = array<i32>} : memref<1x128xf32, #tpu.memory_space<vmem>>, vector<1x128xf32>,
    } else {
    }
    %c0 = arith.constant 0 : index
    %c0_1 = arith.constant 0 : index
    %3 = vector.load %arg1[%c0, %c0_1] : memref<8x128xf32, #tpu.memory_space<vmem>>, vector<8x128xf32>
    %c0_2 = arith.constant 0 : index
    %c0_3 = arith.constant 0 : index
    %4 = vector.load %arg2[%c0_2, %c0_3] : memref<128x128xf32, #tpu.memory_space<vmem>>, vector<128x128xf32>
    %cst = arith.constant dense<0.000000e+00> : vector<8x128xf32>
    %5 = tpu.matmul %3, %4, %cst {dimension_numbers = #tpu.dot_dimension_numbers<[1], [0], [0], [1], [0, 0, 1, 1], [], []>} : vector<8x128xf32>, vector<128x128xf32>, vector<8x128xf32> -> vector<8x128xf32>
    %c0_4 = arith.constant 0 : index
    %c0_5 = arith.constant 0 : index
    %6 = vector.load %arg3[%c0_4, %c0_5] : memref<1x128xf32, #tpu.memory_space<vmem>>, vector<1x128xf32>
    %7 = vector.broadcast %6 : vector<1x128xf32> to vector<8x128xf32>
    %8 = arith.addf %5, %7 : vector<8x128xf32>
    %9 = arith.negf %8 : vector<8x128xf32>
    %10 = math.exp %9 : vector<8x128xf32>
    %cst_6 = arith.constant 1.000000e+00 : f32
    %11 = vector.broadcast %cst_6 : f32 to vector<8x128xf32>
    %12 = arith.addf %11, %10 : vector<8x128xf32>
    %13 = arith.divf %11, %12 : vector<8x128xf32>
    %14 = arith.mulf %3, %13 : vector<8x128xf32>
    %c0_7 = arith.constant 0 : index
    %c0_8 = arith.constant 0 : index
    %15 = vector.load %arg7[%c0_7, %c0_8] : memref<1x128xf32, #tpu.memory_space<vmem>>, vector<1x128xf32>
    %cst_9 = arith.constant dense<0.000000e+00> : vector<128xf32>
    %16 = vector.multi_reduction <add>, %14, %cst_9 [0] : vector<8x128xf32> to vector<128xf32>
    %17 = vector.shape_cast %16 : vector<128xf32> to vector<1x128xf32>
    %18 = arith.addf %15, %17 : vector<1x128xf32>
    %c0_10 = arith.constant 0 : index
    %c0_11 = arith.constant 0 : index
    %19 = vector.load %arg7[%c0_10, %c0_11] : memref<1x128xf32, #tpu.memory_space<vmem>>, vector<1x128xf32>
    tpu.vector_store %arg7[%c0_10, %c0_11], %18 {strides = array<i32>} : memref<1x128xf32, #tpu.memory_space<vmem>>, vector<1x128xf32>,
    %c0_12 = arith.constant 0 : index
    %c0_13 = arith.constant 0 : index
    %20 = vector.load %arg8[%c0_12, %c0_13] : memref<1x128xf32, #tpu.memory_space<vmem>>, vector<1x128xf32>
    %21 = arith.mulf %14, %14 : vector<8x128xf32>
    %cst_14 = arith.constant dense<0.000000e+00> : vector<128xf32>
    %22 = vector.multi_reduction <add>, %21, %cst_14 [0] : vector<8x128xf32> to vector<128xf32>
    %23 = vector.shape_cast %22 : vector<128xf32> to vector<1x128xf32>
    %24 = arith.addf %20, %23 : vector<1x128xf32>
    %c0_15 = arith.constant 0 : index
    %c0_16 = arith.constant 0 : index
    %25 = vector.load %arg8[%c0_15, %c0_16] : memref<1x128xf32, #tpu.memory_space<vmem>>, vector<1x128xf32>
    tpu.vector_store %arg8[%c0_15, %c0_16], %24 {strides = array<i32>} : memref<1x128xf32, #tpu.memory_space<vmem>>, vector<1x128xf32>,
    %c8_i32 = arith.constant 8 : i32
    %26 = arith.muli %arg0, %c8_i32 : i32
    %27 = tpu.assume_multiple %26, 8 : i32
    %28 = arith.index_cast %27 : i32 to index
    %c0_17 = arith.constant 0 : index
    %29 = vector.load %arg6[%28, %c0_17] : memref<8x128xf32, #tpu.memory_space<vmem>>, vector<8x128xf32>
    tpu.vector_store %arg6[%28, %c0_17], %14 {strides = array<i32>} : memref<8x128xf32, #tpu.memory_space<vmem>>, vector<8x128xf32>,
    %c0_i32_18 = arith.constant 0 : i32
    %30 = arith.cmpi eq, %arg0, %c0_i32_18 : i32
    %31 = arith.extui %30 : i1 to i32
    %c0_i32_19 = arith.constant 0 : i32
    %32 = arith.cmpi ne, %31, %c0_i32_19 : i32
    scf.if %32 {
      %c0_20 = arith.constant 0 : index
      %c0_21 = arith.constant 0 : index
      %33 = vector.load %arg7[%c0_20, %c0_21] : memref<1x128xf32, #tpu.memory_space<vmem>>, vector<1x128xf32>
      %cst_22 = arith.constant 1.250000e-01 : f32
      %34 = vector.broadcast %cst_22 : f32 to vector<1x128xf32>
      %35 = arith.mulf %33, %34 : vector<1x128xf32>
      %c0_23 = arith.constant 0 : index
      %c0_24 = arith.constant 0 : index
      %36 = vector.load %arg8[%c0_23, %c0_24] : memref<1x128xf32, #tpu.memory_space<vmem>>, vector<1x128xf32>
      %cst_25 = arith.constant 1.250000e-01 : f32
      %37 = vector.broadcast %cst_25 : f32 to vector<1x128xf32>
      %38 = arith.mulf %36, %37 : vector<1x128xf32>
      %39 = arith.mulf %35, %35 : vector<1x128xf32>
      %40 = arith.subf %38, %39 : vector<1x128xf32>
      %cst_26 = arith.constant 0.000000e+00 : f32
      %41 = vector.broadcast %cst_26 : f32 to vector<1x128xf32>
      %42 = arith.maximumf %40, %41 : vector<1x128xf32>
      %cst_27 = arith.constant 9.99999974E-6 : f32
      %43 = vector.broadcast %cst_27 : f32 to vector<1x128xf32>
      %44 = arith.addf %42, %43 : vector<1x128xf32>
      %45 = math.rsqrt %44 : vector<1x128xf32>
      %c0_28 = arith.constant 0 : index
      %c0_29 = arith.constant 0 : index
      %46 = vector.load %arg4[%c0_28, %c0_29] : memref<1x128xf32, #tpu.memory_space<vmem>>, vector<1x128xf32>
      %47 = arith.mulf %45, %46 : vector<1x128xf32>
      %c0_30 = arith.constant 0 : index
      %c0_31 = arith.constant 0 : index
      %48 = vector.load %arg5[%c0_30, %c0_31] : memref<1x128xf32, #tpu.memory_space<vmem>>, vector<1x128xf32>
      %49 = arith.mulf %35, %47 : vector<1x128xf32>
      %50 = arith.subf %48, %49 : vector<1x128xf32>
      %c0_32 = arith.constant 0 : index
      %c0_33 = arith.constant 0 : index
      %51 = vector.load %arg6[%c0_32, %c0_33] : memref<8x128xf32, #tpu.memory_space<vmem>>, vector<8x128xf32>
      %52 = vector.broadcast %47 : vector<1x128xf32> to vector<8x128xf32>
      %53 = arith.mulf %51, %52 : vector<8x128xf32>
      %54 = vector.broadcast %50 : vector<1x128xf32> to vector<8x128xf32>
      %55 = arith.addf %53, %54 : vector<8x128xf32>
      %c0_34 = arith.constant 0 : index
      %c0_35 = arith.constant 0 : index
      %56 = vector.load %arg6[%c0_34, %c0_35] : memref<8x128xf32, #tpu.memory_space<vmem>>, vector<8x128xf32>
      tpu.vector_store %arg6[%c0_34, %c0_35], %55 {strides = array<i32>} : memref<8x128xf32, #tpu.memory_space<vmem>>, vector<8x128xf32>,
    } else {
    }
    return
  }
  func.func @transform_0(%arg0: i32) -> (i32, i32) {
    %c0_i32 = arith.constant 0 : i32
    %c0_i32_0 = arith.constant 0 : i32
    return %arg0, %c0_i32 : i32, i32
  }
  func.func @transform_1(%arg0: i32) -> (i32, i32) {
    %c0_i32 = arith.constant 0 : i32
    %c0_i32_0 = arith.constant 0 : i32
    %c0_i32_1 = arith.constant 0 : i32
    return %c0_i32, %c0_i32_0 : i32, i32
  }
  func.func @transform_2(%arg0: i32) -> (i32, i32) {
    %c0_i32 = arith.constant 0 : i32
    %c0_i32_0 = arith.constant 0 : i32
    %c0_i32_1 = arith.constant 0 : i32
    return %c0_i32, %c0_i32_0 : i32, i32
  }
  func.func @transform_3(%arg0: i32) -> (i32, i32) {
    %c0_i32 = arith.constant 0 : i32
    %c0_i32_0 = arith.constant 0 : i32
    %c0_i32_1 = arith.constant 0 : i32
    return %c0_i32, %c0_i32_0 : i32, i32
  }
  func.func @transform_4(%arg0: i32) -> (i32, i32) {
    %c0_i32 = arith.constant 0 : i32
    %c0_i32_0 = arith.constant 0 : i32
    %c0_i32_1 = arith.constant 0 : i32
    return %c0_i32, %c0_i32_0 : i32, i32
  }
  func.func @transform_5(%arg0: i32) -> (i32, i32) {
    %c0_i32 = arith.constant 0 : i32
    %c0_i32_0 = arith.constant 0 : i32
    %c0_i32_1 = arith.constant 0 : i32
    return %c0_i32, %c0_i32_0 : i32, i32
  }
}

</mosaic_0001>

<llo_original>
// kernel: tpu_custom_call.1
$region0: #{tpu_custom_call.1}
  #allocation0 [shape = 'u32[]', space=smem, size = 0x4, offset = 0x4, fixed_abs, tag = 'smem constant byte address 0x4 - core index']
  #allocation1 [shape = 'u32[72,128]{1,0:T(1,128)}', space=vmem, size = 0x9000, scoped, tag = 'internal scratch']
  #allocation2 [shape = 'f32[1,128]{1,0:T(1,128)}', space=vmem, size = 0x200, scoped, tag = 'scratch operand']
  #allocation3 [shape = 'f32[1,128]{1,0:T(1,128)}', space=vmem, size = 0x200, scoped, tag = 'scratch operand']
  %s0 = inlined_call_operand.hbm [shape: f32[8,128], index: 0, kind: input, shape index: {}]
  %s1 = inlined_call_operand.hbm [shape: f32[128,128], index: 1, kind: input, shape index: {}]
  %s2 = inlined_call_operand.vmem [shape: f32[1,128], index: 2, kind: input, shape index: {}]
  %s3 = inlined_call_operand.vmem [shape: f32[1,128], index: 3, kind: input, shape index: {}]
  %s4 = inlined_call_operand.vmem [shape: f32[1,128], index: 4, kind: input, shape index: {}]
  %s5 = inlined_call_operand.hbm [shape: f32[8,128], index: 5, kind: output, shape index: {}]
  %s6 = sld [smem:[#allocation0]]
  $region46: #{tpu_custom_call.1} parent=0
    _
  %s8 = ssub.s32 1, %s6
  %s9 = scalar_select 0, %s8, %s6
  $region1: #{tpu_custom_call.1} parent=0
    #allocation4 [shape = 'u8[4096]{0}', space=vmem, size = 0x1000, scoped, tag = 'input window, operand 0, single buffered']
    #allocation5 [shape = 's32[1]{0}', space=sflag, size = 0x4, scoped, tag = 'scoped memory for tpu_custom_call.1']
    #allocation6 [shape = 's32[1]{0}', space=sflag, size = 0x4, scoped, tag = 'scoped memory for tpu_custom_call.1']
    #allocation7 [shape = 'u8[65536]{0}', space=vmem, size = 0x10000, scoped, tag = 'input window, operand 1, single buffered']
    #allocation8 [shape = 's32[1]{0}', space=sflag, size = 0x4, scoped, tag = 'scoped memory for tpu_custom_call.1']
    #allocation9 [shape = 'u8[4096]{0}', space=vmem, size = 0x1000, scoped, tag = 'output window, operand 0, single buffered']
    %10 = vsyncpa [#allocation5], 0
    %11 = vsyncpa [#allocation8], 0
    %12 = vsyncpa [#allocation6], 0
    // Predicated region
    $region2: #{tpu_custom_call.1} parent=1 // pred_check
      _
    $region3: #{tpu_custom_call.1} parent=1 // pred_check_branch
      %14 = sbr.rel (0) target = $region5
    $region4: #{tpu_custom_call.1} parent=1 // pred_region
      %16 = vsyncadd [#allocation5], 0
      %s18 = sshll.u32 %s0, 4
      %s19 = int_to_ptr.hbm [resolvable:$true] %s18
      %s20 = sshll.u32 [#allocation4], 4
      %s21 = int_to_ptr.vmem [resolvable:$true] %s20
      %23 = dma.hbm_to_vmem [thread:$0]  %s19, 128, %s21, [#allocation5]
    $region5: #{tpu_custom_call.1} parent=1 // pred_fallthru
      _
    // Predicated region
    $region6: #{tpu_custom_call.1} parent=1 // pred_check
      _
    $region7: #{tpu_custom_call.1} parent=1 // pred_check_branch
      %25 = sbr.rel (0) target = $region9
    $region8: #{tpu_custom_call.1} parent=1 // pred_region
      %27 = vsyncadd [#allocation8], 0
      %s28 = sshll.u32 %s1, 4
      %s29 = int_to_ptr.hbm [resolvable:$true] %s28
      %s30 = sshll.u32 [#allocation7], 4
      %s31 = int_to_ptr.vmem [resolvable:$true] %s30
      %36 = dma.hbm_to_vmem [thread:$0]  %s29, 2048, %s31, [#allocation8], 128, 128, 8
    $region9: #{tpu_custom_call.1} parent=1 // pred_fallthru
      _
    // Predicated region
    $region10: #{tpu_custom_call.1} parent=1 // pred_check
      _
    $region11: #{tpu_custom_call.1} parent=1 // pred_check_branch
      %38 = sbr.rel (0) target = $region13
    $region12: #{tpu_custom_call.1} parent=1 // pred_region
      _
    $region13: #{tpu_custom_call.1} parent=1 // pred_fallthru
      _
    // Predicated region
    $region14: #{tpu_custom_call.1} parent=1 // pred_check
      _
    $region15: #{tpu_custom_call.1} parent=1 // pred_check_branch
      %40 = sbr.rel (0) target = $region17
    $region16: #{tpu_custom_call.1} parent=1 // pred_region
      _
    $region17: #{tpu_custom_call.1} parent=1 // pred_fallthru
      _
    // Predicated region
    $region18: #{tpu_custom_call.1} parent=1 // pred_check
      _
    $region19: #{tpu_custom_call.1} parent=1 // pred_check_branch
      %42 = sbr.rel (0) target = $region21
    $region20: #{tpu_custom_call.1} parent=1 // pred_region
      _
    $region21: #{tpu_custom_call.1} parent=1 // pred_fallthru
      _
    // Predicated region
    $region22: #{tpu_custom_call.1} parent=1 // pred_check
      _
    $region23: #{tpu_custom_call.1} parent=1 // pred_check_branch
      %44 = sbr.rel (0) target = $region25
    $region24: #{tpu_custom_call.1} parent=1 // pred_region
      %46 = dma.done [#allocation5], 128
    $region25: #{tpu_custom_call.1} parent=1 // pred_fallthru
      _
    // Predicated region
    $region26: #{tpu_custom_call.1} parent=1 // pred_check
      _
    $region27: #{tpu_custom_call.1} parent=1 // pred_check_branch
      %48 = sbr.rel (0) target = $region29
    $region28: #{tpu_custom_call.1} parent=1 // pred_region
      %50 = dma.done [#allocation8], 2048
    $region29: #{tpu_custom_call.1} parent=1 // pred_fallthru
      _
    %p51 = scmp.eq.s32.totalorder 0, 0
    // Predicated region
    $region30: #{tpu_custom_call.1} parent=1 // pred_check
      %p52 = pneg %p51
    $region31: #{tpu_custom_call.1} parent=1 // pred_check_branch
      %54 = sbr.rel (%p52) target = $region33
    $region32: #{tpu_custom_call.1} parent=1 // pred_region
      %55 = vst [vmem:[#allocation2] sm:$0x1] 0.0
      %56 = vst [vmem:[#allocation3] sm:$0x1] 0.0
    $region33: #{tpu_custom_call.1} parent=1 // pred_fallthru
      _
    %v57 = vld [vmem:[#allocation4] sm:$0xff]
    %v58 = vld [vmem:[#allocation7] sm:$0xff]
    %v59 = vld [vmem:[#allocation7 + $0x8] sm:$0xff]
    %v60 = vld [vmem:[#allocation7 + $0x10] sm:$0xff]
    %v61 = vld [vmem:[#allocation7 + $0x18] sm:$0xff]
    %v62 = vld [vmem:[#allocation7 + $0x20] sm:$0xff]
    %v63 = vld [vmem:[#allocation7 + $0x28] sm:$0xff]
    %v64 = vld [vmem:[#allocation7 + $0x30] sm:$0xff]
    %v65 = vld [vmem:[#allocation7 + $0x38] sm:$0xff]
    %v66 = vld [vmem:[#allocation7 + $0x40] sm:$0xff]
    %v67 = vld [vmem:[#allocation7 + $0x48] sm:$0xff]
    %v68 = vld [vmem:[#allocation7 + $0x50] sm:$0xff]
    %v69 = vld [vmem:[#allocation7 + $0x58] sm:$0xff]
    %v70 = vld [vmem:[#allocation7 + $0x60] sm:$0xff]
    %v71 = vld [vmem:[#allocation7 + $0x68] sm:$0xff]
    %v72 = vld [vmem:[#allocation7 + $0x70] sm:$0xff]
    %v73 = vld [vmem:[#allocation7 + $0x78] sm:$0xff]
    %v74 = vld [vmem:[%s2] sm:$0x1]
    %v76 = vperm.slane %v74, 0
    %78 = vmatpush.msra.mxu0 %v73
    %79 = vmatpush.msra.mxu0 %v72
    %80 = vmatpush.msra.mxu0 %v71
    %81 = vmatpush.msra.mxu0 %v70
    %82 = vmatpush.msra.mxu0 %v69
    %83 = vmatpush.msra.mxu0 %v68
    %84 = vmatpush.msra.mxu0 %v67
    %85 = vmatpush.msra.mxu0 %v66
    %86 = vmatpush.msra.mxu0 %v65
    %87 = vmatpush.msra.mxu0 %v64
    %88 = vmatpush.msra.mxu0 %v63
    %89 = vmatpush.msra.mxu0 %v62
    %90 = vmatpush.msra.mxu0 %v61
    %91 = vmatpush.msra.mxu0 %v60
    %92 = vmatpush.msra.mxu0 %v59
    %93 = vmatpush.msra.mxu0 %v58
    %94 = vmatmul.f32.gmra.mxu0 %v57
    %v95 = vpop.f32.mrf.mxu0
    %v96 = vadd.f32 %v76, %v95
    %97 = vdwg.mxu0
    %v98 = vxor.u32 %v96, 2147483648
    %v99 = vmul.f32 %v98, 1.442695
    %v100 = vpow.pop %v99
    %v101 = vadd.f32 %v100, 1.0
    %v102 = vrcp.pop %v101
    %v103 = vmul.f32 %v101, %v102
    %v104 = vsub.f32 1.0, %v103
    %v105 = vmul.f32 %v102, %v104
    %v106 = vadd.f32 %v102, %v105
    %vm107 = vweird.f32 %v101
    %vm108 = vweird.f32 %v102
    %vm109 = vmor %vm107, %vm108
    %v110 = vsel %vm109, %v102, %v106
    %v111 = vand.u32 2147483647, %v101
    %vm112 = vcmp.eq.f32.partialorder %v111, 8.507059e+37
    %v113 = vand.u32 %v101, 2147483648
    %v114 = vor.u32 1.1754944e-38, %v113
    %v115 = vsel %vm112, %v114, %v110
    %v116 = vmul.f32 1.0, %v115
    %v117 = vmul.f32 %v57, %v116
    %v118 = vld [vmem:[#allocation2] sm:$0x1]
    %v119 = vrot.slane %v117, 4
    %v120 = vadd.f32 %v117, %v119
    %v121 = vrot.slane %v120, 2
    %v122 = vadd.f32 %v120, %v121
    %v123 = vrot.slane %v122, 1
    %v124 = vadd.f32 %v122, %v123
    %v125 = vadd.f32 %v118, %v124
    %126 = vst [vmem:[#allocation2] sm:$0x1] %v125
    %v127 = vld [vmem:[#allocation3] sm:$0x1]
    %v128 = vmul.f32 %v117, %v117
    %v129 = vrot.slane %v128, 4
    %v130 = vadd.f32 %v128, %v129
    %v131 = vrot.slane %v130, 2
    %v132 = vadd.f32 %v130, %v131
    %v133 = vrot.slane %v132, 1
    %v134 = vadd.f32 %v132, %v133
    %v135 = vadd.f32 %v127, %v134
    %136 = vst [vmem:[#allocation3] sm:$0x1] %v135
    %s137 = smul.u32 0, 8
    %s138 = scalar_lea.vmem [#allocation9], %s137
    %139 = vst [vmem:[%s138] sm:$0xff] %v117
    // Predicated region
    $region34: #{tpu_custom_call.1} parent=1 // pred_check
      %p140 = pneg %p51
    $region35: #{tpu_custom_call.1} parent=1 // pred_check_branch
      %142 = sbr.rel (%p140) target = $region37
    $region36: #{tpu_custom_call.1} parent=1 // pred_region
      %v143 = vld [vmem:[#allocation2] sm:$0x1]
      %v144 = vmul.f32 %v143, 0.125
      %v145 = vld [vmem:[#allocation3] sm:$0x1]
      %v146 = vmul.f32 %v145, 0.125
      %v147 = vmul.f32 %v144, %v144
      %v148 = vsub.f32 %v146, %v147
      %v149 = vmax.f32 %v148, 0.0
      %v150 = vadd.f32 %v149, 1e-05
      %v151 = vrsqrt.pop %v150
      %v152 = vmul.f32 %v151, %v150
      %v153 = vmul.f32 %v152, %v151
      %v154 = vmul.f32 0.5, %v153
      %v155 = vsub.f32 1.5, %v154
      %v156 = vmul.f32 %v151, %v155
      %vm157 = vweird.f32 %v150
      %vm158 = vweird.f32 %v151
      %vm159 = vmor %vm157, %vm158
      %v160 = vsel %vm159, %v151, %v156
      %v161 = vld [vmem:[%s3] sm:$0x1]
      %v162 = vmul.f32 %v160, %v161
      %v163 = vld [vmem:[%s4] sm:$0x1]
      %v164 = vmul.f32 %v144, %v162
      %v165 = vsub.f32 %v163, %v164
      %v166 = vld [vmem:[#allocation9] sm:$0xff]
      %v168 = vperm.slane %v162, 0
      %v170 = vmul.f32 %v166, %v168
      %v172 = vperm.slane %v165, 0
      %v174 = vadd.f32 %v170, %v172
      %175 = vst [vmem:[#allocation9] sm:$0xff] %v174
    $region37: #{tpu_custom_call.1} parent=1 // pred_fallthru
      _
    // Predicated region
    $region38: #{tpu_custom_call.1} parent=1 // pred_check
      _
    $region39: #{tpu_custom_call.1} parent=1 // pred_check_branch
      %177 = sbr.rel (0) target = $region41
    $region40: #{tpu_custom_call.1} parent=1 // pred_region
      %179 = vsyncadd [#allocation6], 0
      %s181 = sshll.u32 [#allocation9], 4
      %s182 = int_to_ptr.vmem [resolvable:$true] %s181
      %s183 = sshll.u32 %s5, 4
      %s184 = int_to_ptr.hbm [resolvable:$true] %s183
      %186 = dma.vmem_to_hbm [thread:$0]  %s182, 128, %s184, [#allocation6]
    $region41: #{tpu_custom_call.1} parent=1 // pred_fallthru
      _
    // Predicated region
    $region42: #{tpu_custom_call.1} parent=1 // pred_check
      _
    $region43: #{tpu_custom_call.1} parent=1 // pred_check_branch
      %188 = sbr.rel (0) target = $region45
    $region44: #{tpu_custom_call.1} parent=1 // pred_region
      %190 = dma.done [#allocation6], 128
    $region45: #{tpu_custom_call.1} parent=1 // pred_fallthru
      _
    %191 = vsyncpa [#allocation5], 1
    %192 = vsyncpa [#allocation8], 1
    %193 = vsyncpa [#allocation6], 1

</llo_original>
